<compile_context>
chip_gen: v5e
topology: v5e:2x2
jax: 0.10.0
libtpu: 0.0.40
codegen_flags: <defaults>
</compile_context>

<pallas_src>
import functools

import jax
import jax.numpy as jnp
from jax.experimental import pallas as pl
from jax.experimental.pallas import tpu as pltpu


def _patch_embed_kernel(x_ref, w_ref, b_ref, o_ref):
    # x_ref: (tm, K) bf16   w_ref: (K, tn) bf16   b_ref: (1, tn) f32
    # o_ref: (tm, tn).  fp32 accumulation on the MXU, fp32 bias add.
    acc = jnp.dot(x_ref[...], w_ref[...], preferred_element_type=jnp.float32)
    o_ref[...] = (acc + b_ref[...]).astype(o_ref.dtype)


def patch_embed(x, weight, bias, patch_size: int, *, tm: int = 256, tn=None,
                compute_dtype=jnp.bfloat16, conservative: bool = False):
    """x: (B, C, H, W); weight: (E, C, P, P); bias: (E,) -> (B, N, E)."""
    B, C, H, W = x.shape
    E = weight.shape[0]
    P = patch_size
    assert H % P == 0 and W % P == 0, (H, W, P)
    nh, nw = H // P, W // P
    N = nh * nw
    K = C * P * P
    M = B * N

    # Patchify: non-overlapping P x P patches, flattened in (C, kh, kw) order
    # to match Conv2d's OIHW weight layout.  Under jit, allow_input_fusion
    # lets XLA fold this transpose into the pallas_call input DMA.
    patches = x.reshape(B, C, nh, P, nw, P)
    patches = patches.transpose(0, 2, 4, 1, 3, 5).reshape(M, K)
    patches = patches.astype(compute_dtype)

    # NOTE: in a real model do this reshape/transpose/cast once at parameter
    # load time rather than per call (under jit it constant-folds anyway).
    w2d = weight.reshape(E, K).T.astype(compute_dtype)   # (K, E)
    b2d = bias.reshape(1, E).astype(jnp.float32)          # (1, E)

    # Row tiling with remainder handling: pad M up to a multiple of tm; padded
    # rows compute (0 @ W + b) and are sliced off below.
    grid_m = pl.cdiv(M, tm)
    M_pad = grid_m * tm
    if M_pad != M:
        patches = jnp.pad(patches, ((0, M_pad - M), (0, 0)))

    # Optional E tiling (only needed for very large embed dims / tight VMEM).
    if tn is None or tn >= E or E % tn != 0:
        tn_eff, grid_n = E, 1
    else:
        tn_eff, grid_n = tn, E // tn

    # Weight/bias never change block index when grid_n == 1 -> single-buffer
    # them; double-buffering a resident operand only burns VMEM.
    resident = (not conservative) and grid_n == 1
    w_mode = pl.Buffered(1) if resident else None

    cp_kwargs = dict(dimension_semantics=("parallel", "parallel"))
    if not conservative:
        # Let XLA fuse the patchify transpose / pad into the input DMA.
        cp_kwargs["allow_input_fusion"] = [True, False, False]

    out = pl.pallas_call(
        _patch_embed_kernel,
        out_shape=jax.ShapeDtypeStruct((M_pad, E), x.dtype),
        grid_spec=pltpu.PrefetchScalarGridSpec(
            num_scalar_prefetch=0,
            grid=(grid_m, grid_n),
            in_specs=[
                pl.BlockSpec((tm, K), lambda i, j: (i, 0)),
                pl.BlockSpec((K, tn_eff), lambda i, j: (0, j),
                             pipeline_mode=w_mode),
                pl.BlockSpec((1, tn_eff), lambda i, j: (0, j),
                             pipeline_mode=w_mode),
            ],
            out_specs=pl.BlockSpec((tm, tn_eff), lambda i, j: (i, j)),
        ),
        compiler_params=pltpu.CompilerParams(**cp_kwargs),
    )(patches, w2d, b2d)

    return out[:M].reshape(B, N, E)


def _reference(x, weight, bias, P):
    # Pure-JAX fp32 reference: conv with stride=kernel=P, NCHW/OIHW, then
    # flatten(2).transpose(1, 2) -- exactly the PyTorch module.
    y = jax.lax.conv_general_dilated(
        x, weight, window_strides=(P, P), padding="VALID",
        dimension_numbers=("NCHW", "OIHW", "NCHW"))
    y = y + bias.reshape(1, -1, 1, 1)
    B, E, nh, nw = y.shape
    return y.reshape(B, E, nh * nw).transpose(0, 2, 1)


if __name__ == "__main__":
    # Small shapes consistent with the module: patch_size=4, in_chans=3,
    # embed_dim=32, B=2, H=W=16 -> N=16 patches, K=48.  (Toy dims: K and E are
    # sub-128 here, so this run is a correctness check, not a benchmark --
    # benchmark with real V-JEPA dims P=16, E>=768 where K/E are lane-aligned.)
    B, C, H, W = 2, 3, 16, 16
    P, E = 4, 32

    key = jax.random.PRNGKey(0)
    kx, kw, kb = jax.random.split(key, 3)
    x = jax.random.normal(kx, (B, C, H, W), dtype=jnp.float32)
    weight = jax.random.normal(kw, (E, C, P, P), dtype=jnp.float32) * 0.02
    bias = jax.random.normal(kb, (E,), dtype=jnp.float32) * 0.01

    fn = jax.jit(functools.partial(patch_embed, patch_size=P, tm=256))
    try:
        out = jax.block_until_ready(fn(x, weight, bias))
    except Exception:
        # Fallback: drop the optional Mosaic niceties (single-buffered
        # resident weights, input fusion) if this libtpu build rejects them.
        fn = jax.jit(functools.partial(
            patch_embed, patch_size=P, tm=256, conservative=True))
        out = jax.block_until_ready(fn(x, weight, bias))

    ref = _reference(x, weight, bias, P)
    assert out.shape == (B, (H // P) * (W // P), E), out.shape
    # bf16 operands + fp32 accumulation -> loose-ish tolerance vs fp32 conv.
    assert jnp.allclose(out.astype(jnp.float32), ref, atol=2e-2, rtol=2e-2), \
        float(jnp.max(jnp.abs(out.astype(jnp.float32) - ref)))

    print("KERNEL_OK")
</pallas_src>

<mosaic_0001>
module attributes {stable_mosaic.version = 11 : i64} {
  func.func @_patch_embed_kernel(%arg0: i32, %arg1: i32, %arg2: memref<256x48xbf16, #tpu.memory_space<vmem>>, %arg3: memref<48x32xbf16, #tpu.memory_space<vmem>>, %arg4: memref<1x32xf32, #tpu.memory_space<vmem>>, %arg5: memref<256x32xf32, #tpu.memory_space<vmem>>) attributes {dimension_semantics = [#tpu.dimension_semantics<parallel>, #tpu.dimension_semantics<parallel>], iteration_bounds = array<i64: 1, 1>, scalar_prefetch = 0 : i64, scratch_operands = 0 : i64, tpu.core_type = #tpu.core_type<tc>, window_params = [{transform_indices = @transform_0, window_bounds = array<i64: 256, 48>}, {pipeline_mode = #tpu.pipeline_mode<synchronous>, transform_indices = @transform_1, window_bounds = array<i64: 48, 32>}, {pipeline_mode = #tpu.pipeline_mode<synchronous>, transform_indices = @transform_2, window_bounds = array<i64: 1, 32>}, {transform_indices = @transform_3, window_bounds = array<i64: 256, 32>}]} {
    %c0 = arith.constant 0 : index
    %c0_0 = arith.constant 0 : index
    %0 = vector.load %arg2[%c0, %c0_0] : memref<256x48xbf16, #tpu.memory_space<vmem>>, vector<256x48xbf16>
    %c0_1 = arith.constant 0 : index
    %c0_2 = arith.constant 0 : index
    %1 = vector.load %arg3[%c0_1, %c0_2] : memref<48x32xbf16, #tpu.memory_space<vmem>>, vector<48x32xbf16>
    %cst = arith.constant dense<0.000000e+00> : vector<256x32xf32>
    %2 = tpu.matmul %0, %1, %cst {dimension_numbers = #tpu.dot_dimension_numbers<[1], [0], [0], [1], [0, 0, 1, 1], [], []>} : vector<256x48xbf16>, vector<48x32xbf16>, vector<256x32xf32> -> vector<256x32xf32>
    %c0_3 = arith.constant 0 : index
    %c0_4 = arith.constant 0 : index
    %3 = vector.load %arg4[%c0_3, %c0_4] : memref<1x32xf32, #tpu.memory_space<vmem>>, vector<1x32xf32>
    %4 = vector.broadcast %3 : vector<1x32xf32> to vector<256x32xf32>
    %5 = arith.addf %2, %4 : vector<256x32xf32>
    %c0_5 = arith.constant 0 : index
    %c0_6 = arith.constant 0 : index
    %6 = vector.load %arg5[%c0_5, %c0_6] : memref<256x32xf32, #tpu.memory_space<vmem>>, vector<256x32xf32>
    tpu.vector_store %arg5[%c0_5, %c0_6], %5 {strides = array<i32>} : memref<256x32xf32, #tpu.memory_space<vmem>>, vector<256x32xf32>,
    return
  }
  func.func @transform_0(%arg0: i32, %arg1: i32) -> (i32, i32) {
    %c0_i32 = arith.constant 0 : i32
    %c0_i32_0 = arith.constant 0 : i32
    return %arg0, %c0_i32 : i32, i32
  }
  func.func @transform_1(%arg0: i32, %arg1: i32) -> (i32, i32) {
    %c0_i32 = arith.constant 0 : i32
    %c0_i32_0 = arith.constant 0 : i32
    return %c0_i32, %arg1 : i32, i32
  }
  func.func @transform_2(%arg0: i32, %arg1: i32) -> (i32, i32) {
    %c0_i32 = arith.constant 0 : i32
    %c0_i32_0 = arith.constant 0 : i32
    return %c0_i32, %arg1 : i32, i32
  }
  func.func @transform_3(%arg0: i32, %arg1: i32) -> (i32, i32) {
    %c0_i32 = arith.constant 0 : i32
    return %arg0, %arg1 : i32, i32
  }
}

module attributes {stable_mosaic.version = 11 : i64} {
  func.func @_patch_embed_kernel(%arg0: i32, %arg1: i32, %arg2: memref<256x48xbf16, #tpu.memory_space<vmem>>, %arg3: memref<48x32xbf16, #tpu.memory_space<vmem>>, %arg4: memref<1x32xf32, #tpu.memory_space<vmem>>, %arg5: memref<256x32xf32, #tpu.memory_space<vmem>>) attributes {dimension_semantics = [#tpu.dimension_semantics<parallel>, #tpu.dimension_semantics<parallel>], iteration_bounds = array<i64: 1, 1>, scalar_prefetch = 0 : i64, scratch_operands = 0 : i64, tpu.core_type = #tpu.core_type<tc>, window_params = [{transform_indices = @transform_0, window_bounds = array<i64: 256, 48>}, {transform_indices = @transform_1, window_bounds = array<i64: 48, 32>}, {transform_indices = @transform_2, window_bounds = array<i64: 1, 32>}, {transform_indices = @transform_3, window_bounds = array<i64: 256, 32>}]} {
    %c0 = arith.constant 0 : index
    %c0_0 = arith.constant 0 : index
    %0 = vector.load %arg2[%c0, %c0_0] : memref<256x48xbf16, #tpu.memory_space<vmem>>, vector<256x48xbf16>
    %c0_1 = arith.constant 0 : index
    %c0_2 = arith.constant 0 : index
    %1 = vector.load %arg3[%c0_1, %c0_2] : memref<48x32xbf16, #tpu.memory_space<vmem>>, vector<48x32xbf16>
    %cst = arith.constant dense<0.000000e+00> : vector<256x32xf32>
    %2 = tpu.matmul %0, %1, %cst {dimension_numbers = #tpu.dot_dimension_numbers<[1], [0], [0], [1], [0, 0, 1, 1], [], []>} : vector<256x48xbf16>, vector<48x32xbf16>, vector<256x32xf32> -> vector<256x32xf32>
    %c0_3 = arith.constant 0 : index
    %c0_4 = arith.constant 0 : index
    %3 = vector.load %arg4[%c0_3, %c0_4] : memref<1x32xf32, #tpu.memory_space<vmem>>, vector<1x32xf32>
    %4 = vector.broadcast %3 : vector<1x32xf32> to vector<256x32xf32>
    %5 = arith.addf %2, %4 : vector<256x32xf32>
    %c0_5 = arith.constant 0 : index
    %c0_6 = arith.constant 0 : index
    %6 = vector.load %arg5[%c0_5, %c0_6] : memref<256x32xf32, #tpu.memory_space<vmem>>, vector<256x32xf32>
    tpu.vector_store %arg5[%c0_5, %c0_6], %5 {strides = array<i32>} : memref<256x32xf32, #tpu.memory_space<vmem>>, vector<256x32xf32>,
    return
  }
  func.func @transform_0(%arg0: i32, %arg1: i32) -> (i32, i32) {
    %c0_i32 = arith.constant 0 : i32
    %c0_i32_0 = arith.constant 0 : i32
    return %arg0, %c0_i32 : i32, i32
  }
  func.func @transform_1(%arg0: i32, %arg1: i32) -> (i32, i32) {
    %c0_i32 = arith.constant 0 : i32
    %c0_i32_0 = arith.constant 0 : i32
    return %c0_i32, %arg1 : i32, i32
  }
  func.func @transform_2(%arg0: i32, %arg1: i32) -> (i32, i32) {
    %c0_i32 = arith.constant 0 : i32
    %c0_i32_0 = arith.constant 0 : i32
    return %c0_i32, %arg1 : i32, i32
  }
  func.func @transform_3(%arg0: i32, %arg1: i32) -> (i32, i32) {
    %c0_i32 = arith.constant 0 : i32
    return %arg0, %arg1 : i32, i32
  }
}

</mosaic_0001>

<llo_original>
// kernel: patch_embed.2
$region0: #{patch_embed.2}
  #allocation0 [shape = 'u32[]', space=smem, size = 0x4, offset = 0x4, fixed_abs, tag = 'smem constant byte address 0x4 - core index']
  #allocation1 [shape = 'u32[72,128]{1,0:T(1,128)}', space=vmem, size = 0x9000, scoped, tag = 'internal scratch']
  #allocation2 [shape = 'u32[2048]{0}', space=vmem, size = 0x2000, scoped, tag = 'scoped memory for patch_embed.2']
  #allocation3 [shape = 'u32[2048]{0}', space=vmem, size = 0x2000, scoped, tag = 'scoped memory for patch_embed.2']
  #allocation4 [shape = 'u32[2048]{0}', space=vmem, size = 0x2000, scoped, tag = 'scoped memory for patch_embed.2']
  #allocation5 [shape = 'u32[2048]{0}', space=vmem, size = 0x2000, scoped, tag = 'scoped memory for patch_embed.2']
  #allocation6 [shape = 'u32[2048]{0}', space=vmem, size = 0x2000, scoped, tag = 'scoped memory for patch_embed.2']
  %s0 = inlined_call_operand.vmem [shape: bf16[48,32], index: 0, kind: input, shape index: {}]
  %s1 = inlined_call_operand.vmem [shape: f32[1,32], index: 1, kind: input, shape index: {}]
  %s2 = inlined_call_operand.vmem [shape: bf16[32,48], index: 2, kind: input, shape index: {}]
  %s3 = inlined_call_operand.<no memory space> [shape: bf16[], index: 3, kind: input, shape index: {}]
  %s4 = inlined_call_operand.vmem [shape: f32[256,32], index: 4, kind: output, shape index: {}]
  %s5 = sld [smem:[#allocation0]]
  $region22: #{patch_embed.2} parent=0
    _
  %s7 = ssub.s32 1, %s5
  %s8 = scalar_select 0, %s7, %s5
  %v9 = vstv %s3
  %v10 = vunpack.i.l.bf16 %v9
  %v12 = vunpack.i.h.bf16 %v9
  $region1: #{patch_embed.2} parent=0
    #allocation7 [shape = 'u8[65536]{0}', space=vmem, size = 0x10000, dematerialized = true, scoped, tag = 'FusionAdapter Buffer %fusion.1 = bf16[256,48]{1,0:T(8,128)(2,1)} fusion(%param_2.1, %param_3), kind=kLoop, calls=%fused_computation.2.clone, metadata={op_name="jit(patch_embed)/jit(_pad)/pad" stack_frame_id=12}']
    // Predicated region
    $region2: #{patch_embed.2} parent=1 // pred_check
      _
    $region3: #{patch_embed.2} parent=1 // pred_check_branch
      %15 = sbr.rel (0) target = $region5
    $region4: #{patch_embed.2} parent=1 // pred_region
      _
    $region5: #{patch_embed.2} parent=1 // pred_fallthru
      _
    // Predicated region
    $region6: #{patch_embed.2} parent=1 // pred_check
      _
    $region7: #{patch_embed.2} parent=1 // pred_check_branch
      %17 = sbr.rel (0) target = $region9
    $region8: #{patch_embed.2} parent=1 // pred_region
      _
    $region9: #{patch_embed.2} parent=1 // pred_fallthru
      _
    // Predicated region
    $region10: #{patch_embed.2} parent=1 // pred_check
      _
    $region11: #{patch_embed.2} parent=1 // pred_check_branch
      %19 = sbr.rel (0) target = $region13
    $region12: #{patch_embed.2} parent=1 // pred_region
      _
    $region13: #{patch_embed.2} parent=1 // pred_fallthru
      _
    %s21 = sor.u32 255, 127
    %s22 = sand.u32 %s21, 85
    %s23 = sshrl.u32 %s22, 1
    %s24 = sor.u32 %s22, %s23
    %s25 = sand.u32 51, %s24
    %s26 = sshrl.u32 %s25, 2
    %s27 = sor.u32 %s25, %s26
    %s28 = sand.u32 15, %s27
    %v29 = vld [vmem:[%s2] sm:%s28]
    %v30 = vunpack.c.l.bf16 %v29
    %v31 = vunpack.c.h.bf16 %v29
    %v32 = vlaneseq
    %v33 = vand.u32 %v32, 127
    %vm35 = vcmp.lt.s32.totalorder %v33, 48
    %v36 = vsel %vm35, %v30, %v10
    %v37 = vpack.c.bf16 0.0, %v36
    %s39 = ssub.s32 16, 1
    %40 = vst [vmem:[#allocation7] sm:%s39] %v37
    %s41 = scalar_lea.vmem %s2, 4
    %s43 = sor.u32 255, 127
    %s44 = sand.u32 %s43, 85
    %s45 = sshrl.u32 %s44, 1
    %s46 = sor.u32 %s44, %s45
    %s47 = sand.u32 51, %s46
    %s48 = sshrl.u32 %s47, 2
    %s49 = sor.u32 %s47, %s48
    %s50 = sand.u32 15, %s49
    %v51 = vld [vmem:[%s41] sm:%s50]
    %v52 = vunpack.c.l.bf16 %v51
    %v53 = vunpack.c.h.bf16 %v51
    %v54 = vlaneseq
    %v55 = vand.u32 %v54, 127
    %vm57 = vcmp.lt.s32.totalorder %v55, 48
    %v58 = vsel %vm57, %v52, %v10
    %s59 = scalar_lea.vmem [#allocation7], 4
    %v60 = vpack.c.bf16 0.0, %v58
    %s62 = ssub.s32 16, 1
    %63 = vst [vmem:[%s59] sm:%s62] %v60
    %s64 = scalar_lea.vmem %s2, 8
    %s66 = sor.u32 255, 127
    %s67 = sand.u32 %s66, 85
    %s68 = sshrl.u32 %s67, 1
    %s69 = sor.u32 %s67, %s68
    %s70 = sand.u32 51, %s69
    %s71 = sshrl.u32 %s70, 2
    %s72 = sor.u32 %s70, %s71
    %s73 = sand.u32 15, %s72
    %v74 = vld [vmem:[%s64] sm:%s73]
    %v75 = vunpack.c.l.bf16 %v74
    %v76 = vunpack.c.h.bf16 %v74
    %v77 = vlaneseq
    %v78 = vand.u32 %v77, 127
    %vm80 = vcmp.lt.s32.totalorder %v78, 48
    %v81 = vsel %vm80, %v75, %v10
    %s82 = scalar_lea.vmem [#allocation7], 8
    %v83 = vpack.c.bf16 0.0, %v81
    %s85 = ssub.s32 16, 1
    %86 = vst [vmem:[%s82] sm:%s85] %v83
    %s87 = scalar_lea.vmem %s2, 12
    %s89 = sor.u32 255, 127
    %s90 = sand.u32 %s89, 85
    %s91 = sshrl.u32 %s90, 1
    %s92 = sor.u32 %s90, %s91
    %s93 = sand.u32 51, %s92
    %s94 = sshrl.u32 %s93, 2
    %s95 = sor.u32 %s93, %s94
    %s96 = sand.u32 15, %s95
    %v97 = vld [vmem:[%s87] sm:%s96]
    %v98 = vunpack.c.l.bf16 %v97
    %v99 = vunpack.c.h.bf16 %v97
    %v100 = vlaneseq
    %v101 = vand.u32 %v100, 127
    %vm103 = vcmp.lt.s32.totalorder %v101, 48
    %v104 = vsel %vm103, %v98, %v10
    %s105 = scalar_lea.vmem [#allocation7], 12
    %v106 = vpack.c.bf16 0.0, %v104
    %s108 = ssub.s32 16, 1
    %109 = vst [vmem:[%s105] sm:%s108] %v106
    %s110 = scalar_lea.vmem [#allocation7], 16
    %v111 = vpack.c.bf16 0.0, %v10
    %s113 = ssub.s32 16, 1
    %114 = vst [vmem:[%s110] sm:%s113] %v111
    %s115 = scalar_lea.vmem [#allocation7], 20
    %v116 = vpack.c.bf16 0.0, %v10
    %s118 = ssub.s32 16, 1
    %119 = vst [vmem:[%s115] sm:%s118] %v116
    %s120 = scalar_lea.vmem [#allocation7], 24
    %v121 = vpack.c.bf16 0.0, %v10
    %s123 = ssub.s32 16, 1
    %124 = vst [vmem:[%s120] sm:%s123] %v121
    %s125 = scalar_lea.vmem [#allocation7], 28
    %v126 = vpack.c.bf16 0.0, %v10
    %s128 = ssub.s32 16, 1
    %129 = vst [vmem:[%s125] sm:%s128] %v126
    %s130 = scalar_lea.vmem [#allocation7], 32
    %v131 = vpack.c.bf16 0.0, %v10
    %s133 = ssub.s32 16, 1
    %134 = vst [vmem:[%s130] sm:%s133] %v131
    %s135 = scalar_lea.vmem [#allocation7], 36
    %v136 = vpack.c.bf16 0.0, %v10
    %s138 = ssub.s32 16, 1
    %139 = vst [vmem:[%s135] sm:%s138] %v136
    %s140 = scalar_lea.vmem [#allocation7], 40
    %v141 = vpack.c.bf16 0.0, %v10
    %s143 = ssub.s32 16, 1
    %144 = vst [vmem:[%s140] sm:%s143] %v141
    %s145 = scalar_lea.vmem [#allocation7], 44
    %v146 = vpack.c.bf16 0.0, %v10
    %s148 = ssub.s32 16, 1
    %149 = vst [vmem:[%s145] sm:%s148] %v146
    %s150 = scalar_lea.vmem [#allocation7], 48
    %v151 = vpack.c.bf16 0.0, %v10
    %s153 = ssub.s32 16, 1
    %154 = vst [vmem:[%s150] sm:%s153] %v151
    %s155 = scalar_lea.vmem [#allocation7], 52
    %v156 = vpack.c.bf16 0.0, %v10
    %s158 = ssub.s32 16, 1
    %159 = vst [vmem:[%s155] sm:%s158] %v156
    %s160 = scalar_lea.vmem [#allocation7], 56
    %v161 = vpack.c.bf16 0.0, %v10
    %s163 = ssub.s32 16, 1
    %164 = vst [vmem:[%s160] sm:%s163] %v161
    %s165 = scalar_lea.vmem [#allocation7], 60
    %v166 = vpack.c.bf16 0.0, %v10
    %s168 = ssub.s32 16, 1
    %169 = vst [vmem:[%s165] sm:%s168] %v166
    %s170 = scalar_lea.vmem [#allocation7], 64
    %v171 = vpack.c.bf16 0.0, %v10
    %s173 = ssub.s32 16, 1
    %174 = vst [vmem:[%s170] sm:%s173] %v171
    %s175 = scalar_lea.vmem [#allocation7], 68
    %v176 = vpack.c.bf16 0.0, %v10
    %s178 = ssub.s32 16, 1
    %179 = vst [vmem:[%s175] sm:%s178] %v176
    %s180 = scalar_lea.vmem [#allocation7], 72
    %v181 = vpack.c.bf16 0.0, %v10
    %s183 = ssub.s32 16, 1
    %184 = vst [vmem:[%s180] sm:%s183] %v181
    %s185 = scalar_lea.vmem [#allocation7], 76
    %v186 = vpack.c.bf16 0.0, %v10
    %s188 = ssub.s32 16, 1
    %189 = vst [vmem:[%s185] sm:%s188] %v186
    %s190 = scalar_lea.vmem [#allocation7], 80
    %v191 = vpack.c.bf16 0.0, %v10
    %s193 = ssub.s32 16, 1
    %194 = vst [vmem:[%s190] sm:%s193] %v191
    %s195 = scalar_lea.vmem [#allocation7], 84
    %v196 = vpack.c.bf16 0.0, %v10
    %s198 = ssub.s32 16, 1
    %199 = vst [vmem:[%s195] sm:%s198] %v196
    %s200 = scalar_lea.vmem [#allocation7], 88
    %v201 = vpack.c.bf16 0.0, %v10
    %s203 = ssub.s32 16, 1
    %204 = vst [vmem:[%s200] sm:%s203] %v201
    %s205 = scalar_lea.vmem [#allocation7], 92
    %v206 = vpack.c.bf16 0.0, %v10
    %s208 = ssub.s32 16, 1
    %209 = vst [vmem:[%s205] sm:%s208] %v206
    %s210 = scalar_lea.vmem [#allocation7], 96
    %v211 = vpack.c.bf16 0.0, %v10
    %s213 = ssub.s32 16, 1
    %214 = vst [vmem:[%s210] sm:%s213] %v211
    %s215 = scalar_lea.vmem [#allocation7], 100
    %v216 = vpack.c.bf16 0.0, %v10
    %s218 = ssub.s32 16, 1
    %219 = vst [vmem:[%s215] sm:%s218] %v216
    %s220 = scalar_lea.vmem [#allocation7], 104
    %v221 = vpack.c.bf16 0.0, %v10
    %s223 = ssub.s32 16, 1
    %224 = vst [vmem:[%s220] sm:%s223] %v221
    %s225 = scalar_lea.vmem [#allocation7], 108
    %v226 = vpack.c.bf16 0.0, %v10
    %s228 = ssub.s32 16, 1
    %229 = vst [vmem:[%s225] sm:%s228] %v226
    %s230 = scalar_lea.vmem [#allocation7], 112
    %v231 = vpack.c.bf16 0.0, %v10
    %s233 = ssub.s32 16, 1
    %234 = vst [vmem:[%s230] sm:%s233] %v231
    %s235 = scalar_lea.vmem [#allocation7], 116
    %v236 = vpack.c.bf16 0.0, %v10
    %s238 = ssub.s32 16, 1
    %239 = vst [vmem:[%s235] sm:%s238] %v236
    %s240 = scalar_lea.vmem [#allocation7], 120
    %v241 = vpack.c.bf16 0.0, %v10
    %s243 = ssub.s32 16, 1
    %244 = vst [vmem:[%s240] sm:%s243] %v241
    %s245 = scalar_lea.vmem [#allocation7], 124
    %v246 = vpack.c.bf16 0.0, %v10
    %s248 = ssub.s32 16, 1
    %249 = vst [vmem:[%s245] sm:%s248] %v246
    %v251 = vld [vmem:[#allocation7] sm:$0xf]
    %v252 = vld [vmem:[#allocation7 + $0x4] sm:$0xf]
    %v253 = vld [vmem:[#allocation7 + $0x8] sm:$0xf]
    %v254 = vld [vmem:[#allocation7 + $0xc] sm:$0xf]
    %v255 = vld [vmem:[#allocation7 + $0x10] sm:$0xf]
    %v256 = vld [vmem:[#allocation7 + $0x14] sm:$0xf]
    %v257 = vld [vmem:[#allocation7 + $0x18] sm:$0xf]
    %v258 = vld [vmem:[#allocation7 + $0x1c] sm:$0xf]
    %v259 = vld [vmem:[#allocation7 + $0x20] sm:$0xf]
    %v260 = vld [vmem:[#allocation7 + $0x24] sm:$0xf]
    %v261 = vld [vmem:[#allocation7 + $0x28] sm:$0xf]
    %v262 = vld [vmem:[#allocation7 + $0x2c] sm:$0xf]
    %v263 = vld [vmem:[#allocation7 + $0x30] sm:$0xf]
    %v264 = vld [vmem:[#allocation7 + $0x34] sm:$0xf]
    %v265 = vld [vmem:[#allocation7 + $0x38] sm:$0xf]
    %v266 = vld [vmem:[#allocation7 + $0x3c] sm:$0xf]
    %v267 = vld [vmem:[#allocation7 + $0x40] sm:$0xf]
    %v268 = vld [vmem:[#allocation7 + $0x44] sm:$0xf]
    %v269 = vld [vmem:[#allocation7 + $0x48] sm:$0xf]
    %v270 = vld [vmem:[#allocation7 + $0x4c] sm:$0xf]
    %v271 = vld [vmem:[#allocation7 + $0x50] sm:$0xf]
    %v272 = vld [vmem:[#allocation7 + $0x54] sm:$0xf]
    %v273 = vld [vmem:[#allocation7 + $0x58] sm:$0xf]
    %v274 = vld [vmem:[#allocation7 + $0x5c] sm:$0xf]
    %v275 = vld [vmem:[#allocation7 + $0x60] sm:$0xf]
    %v276 = vld [vmem:[#allocation7 + $0x64] sm:$0xf]
    %v277 = vld [vmem:[#allocation7 + $0x68] sm:$0xf]
    %v278 = vld [vmem:[#allocation7 + $0x6c] sm:$0xf]
    %v279 = vld [vmem:[#allocation7 + $0x70] sm:$0xf]
    %v280 = vld [vmem:[#allocation7 + $0x74] sm:$0xf]
    %v281 = vld [vmem:[#allocation7 + $0x78] sm:$0xf]
    %v282 = vld [vmem:[#allocation7 + $0x7c] sm:$0xf]
    %v283 = vld [vmem:[%s0] sm:$0xf]
    %v284 = vld [vmem:[%s0 + $0x4] sm:$0xf]
    %v285 = vld [vmem:[%s0 + $0x8] sm:$0xf]
    %v286 = vld [vmem:[%s0 + $0xc] sm:$0xf]
    %v287 = vld [vmem:[%s0 + $0x10] sm:$0xf]
    %v288 = vld [vmem:[%s0 + $0x14] sm:$0xf]
    %v289 = vld [vmem:[%s1] sm:$0x1]
    %v291 = vperm.slane %v289, 0
    %v325 = vunpack.c.l.b16 %v251
    %v326 = vunpack.c.l.b16 %v252
    %v327 = vunpack.c.l.b16 %v253
    %v328 = vunpack.c.l.b16 %v254
    %v329 = vunpack.c.l.b16 %v255
    %v330 = vunpack.c.l.b16 %v256
    %v331 = vunpack.c.l.b16 %v257
    %v332 = vunpack.c.l.b16 %v258
    %v333 = vunpack.c.l.b16 %v259
    %v334 = vunpack.c.l.b16 %v260
    %v335 = vunpack.c.l.b16 %v261
    %v336 = vunpack.c.l.b16 %v262
    %v337 = vunpack.c.l.b16 %v263
    %v338 = vunpack.c.l.b16 %v264
    %v339 = vunpack.c.l.b16 %v265
    %v340 = vunpack.c.l.b16 %v266
    %v341 = vunpack.c.l.b16 %v267
    %v342 = vunpack.c.l.b16 %v268
    %v343 = vunpack.c.l.b16 %v269
    %v344 = vunpack.c.l.b16 %v270
    %v345 = vunpack.c.l.b16 %v271
    %v346 = vunpack.c.l.b16 %v272
    %v347 = vunpack.c.l.b16 %v273
    %v348 = vunpack.c.l.b16 %v274
    %v349 = vunpack.c.l.b16 %v275
    %v350 = vunpack.c.l.b16 %v276
    %v351 = vunpack.c.l.b16 %v277
    %v352 = vunpack.c.l.b16 %v278
    %v353 = vunpack.c.l.b16 %v279
    %v354 = vunpack.c.l.b16 %v280
    %v355 = vunpack.c.l.b16 %v281
    %v356 = vunpack.c.l.b16 %v282
    %v357 = vpack.c.b16 %v326, %v325
    %v358 = vpack.c.b16 %v328, %v327
    %v359 = vpack.c.b16 %v330, %v329
    %v360 = vpack.c.b16 %v332, %v331
    %v361 = vpack.c.b16 %v334, %v333
    %v362 = vpack.c.b16 %v336, %v335
    %v363 = vpack.c.b16 %v338, %v337
    %v364 = vpack.c.b16 %v340, %v339
    %v365 = vpack.c.b16 %v342, %v341
    %v366 = vpack.c.b16 %v344, %v343
    %v367 = vpack.c.b16 %v346, %v345
    %v368 = vpack.c.b16 %v348, %v347
    %v369 = vpack.c.b16 %v350, %v349
    %v370 = vpack.c.b16 %v352, %v351
    %v371 = vpack.c.b16 %v354, %v353
    %v372 = vpack.c.b16 %v356, %v355
    %v379 = vunpack.c.l.b16 %v283
    %v380 = vunpack.c.l.b16 %v284
    %v381 = vunpack.c.l.b16 %v285
    %v382 = vunpack.c.l.b16 %v286
    %v383 = vunpack.c.l.b16 %v287
    %v384 = vunpack.c.l.b16 %v288
    %v385 = vpack.c.b16 %v380, %v379
    %v386 = vpack.c.b16 %v382, %v381
    %v387 = vpack.c.b16 %v384, %v383
    %vm391 = vcmask 392192
    %v393 = vsel %vm391, %v357, 0
    %v396 = vsel %vm391, %v358, 0
    %v399 = vsel %vm391, %v359, 0
    %v402 = vsel %vm391, %v360, 0
    %v405 = vsel %vm391, %v361, 0
    %v408 = vsel %vm391, %v362, 0
    %v411 = vsel %vm391, %v363, 0
    %v414 = vsel %vm391, %v364, 0
    %v417 = vsel %vm391, %v365, 0
    %v420 = vsel %vm391, %v366, 0
    %v423 = vsel %vm391, %v367, 0
    %v426 = vsel %vm391, %v368, 0
    %v429 = vsel %vm391, %v369, 0
    %v432 = vsel %vm391, %v370, 0
    %v435 = vsel %vm391, %v371, 0
    %v438 = vsel %vm391, %v372, 0
    %440 = vmatpush.bf16.msra.mxu0 0
    %441 = vmatpush.bf16.msra.mxu0 0
    %442 = vmatpush.bf16.msra.mxu0 0
    %443 = vmatpush.bf16.msra.mxu0 0
    %444 = vmatpush.bf16.msra.mxu0 0
    %445 = vmatpush.bf16.msra.mxu0 %v387
    %446 = vmatpush.bf16.msra.mxu0 %v386
    %447 = vmatpush.bf16.msra.mxu0 %v385
    %448 = vmatmul.bf16.gmra.mxu0 %v393
    %v449 = vpop.f32.mrf.mxu0
    %v450 = vadd.f32 %v291, %v449
    %v451 = vpop.f32.mrf.mxu0
    %v452 = vadd.f32 %v291, %v451
    %453 = vmatmul.bf16.gmra.mxu0 %v396
    %v454 = vpop.f32.mrf.mxu0
    %v455 = vadd.f32 %v291, %v454
    %v456 = vpop.f32.mrf.mxu0
    %v457 = vadd.f32 %v291, %v456
    %458 = vmatmul.bf16.gmra.mxu0 %v399
    %v459 = vpop.f32.mrf.mxu0
    %v460 = vadd.f32 %v291, %v459
    %v461 = vpop.f32.mrf.mxu0
    %v462 = vadd.f32 %v291, %v461
    %463 = vmatmul.bf16.gmra.mxu0 %v402
    %v464 = vpop.f32.mrf.mxu0
    %v465 = vadd.f32 %v291, %v464
    %v466 = vpop.f32.mrf.mxu0
    %v467 = vadd.f32 %v291, %v466
    %468 = vmatmul.bf16.gmra.mxu0 %v405
    %v469 = vpop.f32.mrf.mxu0
    %v470 = vadd.f32 %v291, %v469
    %v471 = vpop.f32.mrf.mxu0
    %v472 = vadd.f32 %v291, %v471
    %473 = vmatmul.bf16.gmra.mxu0 %v408
    %v474 = vpop.f32.mrf.mxu0
    %v475 = vadd.f32 %v291, %v474
    %v476 = vpop.f32.mrf.mxu0
    %v477 = vadd.f32 %v291, %v476
    %478 = vmatmul.bf16.gmra.mxu0 %v411
    %v479 = vpop.f32.mrf.mxu0
    %v480 = vadd.f32 %v291, %v479
    %v481 = vpop.f32.mrf.mxu0
    %v482 = vadd.f32 %v291, %v481
    %483 = vmatmul.bf16.gmra.mxu0 %v414
    %v484 = vpop.f32.mrf.mxu0
    %v485 = vadd.f32 %v291, %v484
    %v486 = vpop.f32.mrf.mxu0
    %v487 = vadd.f32 %v291, %v486
    %488 = vmatmul.bf16.gmra.mxu0 %v417
    %v489 = vpop.f32.mrf.mxu0
    %v490 = vadd.f32 %v291, %v489
    %v491 = vpop.f32.mrf.mxu0
    %v492 = vadd.f32 %v291, %v491
    %493 = vmatmul.bf16.gmra.mxu0 %v420
    %v494 = vpop.f32.mrf.mxu0
    %v495 = vadd.f32 %v291, %v494
    %v496 = vpop.f32.mrf.mxu0
    %v497 = vadd.f32 %v291, %v496
    %498 = vmatmul.bf16.gmra.mxu0 %v423
    %v499 = vpop.f32.mrf.mxu0
    %v500 = vadd.f32 %v291, %v499
    %v501 = vpop.f32.mrf.mxu0
    %v502 = vadd.f32 %v291, %v501
    %503 = vmatmul.bf16.gmra.mxu0 %v426
    %v504 = vpop.f32.mrf.mxu0
    %v505 = vadd.f32 %v291, %v504
    %v506 = vpop.f32.mrf.mxu0
    %v507 = vadd.f32 %v291, %v506
    %508 = vmatmul.bf16.gmra.mxu0 %v429
    %v509 = vpop.f32.mrf.mxu0
    %v510 = vadd.f32 %v291, %v509
    %v511 = vpop.f32.mrf.mxu0
    %v512 = vadd.f32 %v291, %v511
    %513 = vmatmul.bf16.gmra.mxu0 %v432
    %v514 = vpop.f32.mrf.mxu0
    %v515 = vadd.f32 %v291, %v514
    %v516 = vpop.f32.mrf.mxu0
    %v517 = vadd.f32 %v291, %v516
    %518 = vmatmul.bf16.gmra.mxu0 %v435
    %v519 = vpop.f32.mrf.mxu0
    %v520 = vadd.f32 %v291, %v519
    %v521 = vpop.f32.mrf.mxu0
    %v522 = vadd.f32 %v291, %v521
    %523 = vmatmul.bf16.gmra.mxu0 %v438
    %v524 = vpop.f32.mrf.mxu0
    %v525 = vadd.f32 %v291, %v524
    %v526 = vpop.f32.mrf.mxu0
    %v527 = vadd.f32 %v291, %v526
    %528 = vdwg.mxu0
    %vm529 = vcmask 261120
    %530 = vst.msk [vmem:[%s4] sm:$0xff] %vm529, %v450
    %531 = vst.msk [vmem:[%s4 + $0x8] sm:$0xff] %vm529, %v452
    %532 = vst.msk [vmem:[%s4 + $0x10] sm:$0xff] %vm529, %v455
    %533 = vst.msk [vmem:[%s4 + $0x18] sm:$0xff] %vm529, %v457
    %534 = vst.msk [vmem:[%s4 + $0x20] sm:$0xff] %vm529, %v460
    %535 = vst.msk [vmem:[%s4 + $0x28] sm:$0xff] %vm529, %v462
    %536 = vst.msk [vmem:[%s4 + $0x30] sm:$0xff] %vm529, %v465
    %537 = vst.msk [vmem:[%s4 + $0x38] sm:$0xff] %vm529, %v467
    %538 = vst.msk [vmem:[%s4 + $0x40] sm:$0xff] %vm529, %v470
    %539 = vst.msk [vmem:[%s4 + $0x48] sm:$0xff] %vm529, %v472
    %540 = vst.msk [vmem:[%s4 + $0x50] sm:$0xff] %vm529, %v475
    %541 = vst.msk [vmem:[%s4 + $0x58] sm:$0xff] %vm529, %v477
    %542 = vst.msk [vmem:[%s4 + $0x60] sm:$0xff] %vm529, %v480
    %543 = vst.msk [vmem:[%s4 + $0x68] sm:$0xff] %vm529, %v482
    %544 = vst.msk [vmem:[%s4 + $0x70] sm:$0xff] %vm529, %v485
    %545 = vst.msk [vmem:[%s4 + $0x78] sm:$0xff] %vm529, %v487
    %546 = vst.msk [vmem:[%s4 + $0x80] sm:$0xff] %vm529, %v490
    %547 = vst.msk [vmem:[%s4 + $0x88] sm:$0xff] %vm529, %v492
    %548 = vst.msk [vmem:[%s4 + $0x90] sm:$0xff] %vm529, %v495
    %549 = vst.msk [vmem:[%s4 + $0x98] sm:$0xff] %vm529, %v497
    %550 = vst.msk [vmem:[%s4 + $0xa0] sm:$0xff] %vm529, %v500
    %551 = vst.msk [vmem:[%s4 + $0xa8] sm:$0xff] %vm529, %v502
    %552 = vst.msk [vmem:[%s4 + $0xb0] sm:$0xff] %vm529, %v505
    %553 = vst.msk [vmem:[%s4 + $0xb8] sm:$0xff] %vm529, %v507
    %554 = vst.msk [vmem:[%s4 + $0xc0] sm:$0xff] %vm529, %v510
    %555 = vst.msk [vmem:[%s4 + $0xc8] sm:$0xff] %vm529, %v512
    %556 = vst.msk [vmem:[%s4 + $0xd0] sm:$0xff] %vm529, %v515
    %557 = vst.msk [vmem:[%s4 + $0xd8] sm:$0xff] %vm529, %v517
    %558 = vst.msk [vmem:[%s4 + $0xe0] sm:$0xff] %vm529, %v520
    %559 = vst.msk [vmem:[%s4 + $0xe8] sm:$0xff] %vm529, %v522
    %560 = vst.msk [vmem:[%s4 + $0xf0] sm:$0xff] %vm529, %v525
    %561 = vst.msk [vmem:[%s4 + $0xf8] sm:$0xff] %vm529, %v527
    // Predicated region
    $region14: #{patch_embed.2} parent=1 // pred_check
      _
    $region15: #{patch_embed.2} parent=1 // pred_check_branch
      %563 = sbr.rel (0) target = $region17
    $region16: #{patch_embed.2} parent=1 // pred_region
      _
    $region17: #{patch_embed.2} parent=1 // pred_fallthru
      _
    // Predicated region
    $region18: #{patch_embed.2} parent=1 // pred_check
      _
    $region19: #{patch_embed.2} parent=1 // pred_check_branch
      %565 = sbr.rel (0) target = $region21
    $region20: #{patch_embed.2} parent=1 // pred_region
      _
    $region21: #{patch_embed.2} parent=1 // pred_fallthru
      _

// kernel: patch_embed.1
$region0: #{patch_embed.1}
  #allocation0 [shape = 'u32[]', space=smem, size = 0x4, offset = 0x4, fixed_abs, tag = 'smem constant byte address 0x4 - core index']
  #allocation1 [shape = 'u32[72,128]{1,0:T(1,128)}', space=vmem, size = 0x9000, scoped, tag = 'internal scratch']
  %s0 = inlined_call_operand.vmem [shape: bf16[256,48], index: 0, kind: input, shape index: {}]
  %s1 = inlined_call_operand.vmem [shape: bf16[48,32], index: 1, kind: input, shape index: {}]
  %s2 = inlined_call_operand.vmem [shape: f32[1,32], index: 2, kind: input, shape index: {}]
  %s3 = inlined_call_operand.vmem [shape: f32[256,32], index: 3, kind: output, shape index: {}]
  %s4 = sld [smem:[#allocation0]]
  $region22: #{patch_embed.1} parent=0
    _
  %s6 = ssub.s32 1, %s4
  %s7 = scalar_select 0, %s6, %s4
  // Predicated region
  $region2: #{patch_embed.1} parent=0 // pred_check
    _
  $region3: #{patch_embed.1} parent=0 // pred_check_branch
    %9 = sbr.rel (0) target = $region5
  $region4: #{patch_embed.1} parent=0 // pred_region
    _
  $region5: #{patch_embed.1} parent=0 // pred_fallthru
    _
  // Predicated region
  $region6: #{patch_embed.1} parent=0 // pred_check
    _
  $region7: #{patch_embed.1} parent=0 // pred_check_branch
    %11 = sbr.rel (0) target = $region9
  $region8: #{patch_embed.1} parent=0 // pred_region
    _
  $region9: #{patch_embed.1} parent=0 // pred_fallthru
    _
  // Predicated region
  $region10: #{patch_embed.1} parent=0 // pred_check
    _
  $region11: #{patch_embed.1} parent=0 // pred_check_branch
    %13 = sbr.rel (0) target = $region13
  $region12: #{patch_embed.1} parent=0 // pred_region
    _
  $region13: #{patch_embed.1} parent=0 // pred_fallthru
    _
  %v15 = vld [vmem:[%s0] sm:$0xf]
  %v16 = vld [vmem:[%s0 + $0x4] sm:$0xf]
  %v17 = vld [vmem:[%s0 + $0x8] sm:$0xf]
  %v18 = vld [vmem:[%s0 + $0xc] sm:$0xf]
  %v19 = vld [vmem:[%s0 + $0x10] sm:$0xf]
  %v20 = vld [vmem:[%s0 + $0x14] sm:$0xf]
  %v21 = vld [vmem:[%s0 + $0x18] sm:$0xf]
  %v22 = vld [vmem:[%s0 + $0x1c] sm:$0xf]
  %v23 = vld [vmem:[%s0 + $0x20] sm:$0xf]
  %v24 = vld [vmem:[%s0 + $0x24] sm:$0xf]
  %v25 = vld [vmem:[%s0 + $0x28] sm:$0xf]
  %v26 = vld [vmem:[%s0 + $0x2c] sm:$0xf]
  %v27 = vld [vmem:[%s0 + $0x30] sm:$0xf]
  %v28 = vld [vmem:[%s0 + $0x34] sm:$0xf]
  %v29 = vld [vmem:[%s0 + $0x38] sm:$0xf]
  %v30 = vld [vmem:[%s0 + $0x3c] sm:$0xf]
  %v31 = vld [vmem:[%s0 + $0x40] sm:$0xf]
  %v32 = vld [vmem:[%s0 + $0x44] sm:$0xf]
  %v33 = vld [vmem:[%s0 + $0x48] sm:$0xf]
  %v34 = vld [vmem:[%s0 + $0x4c] sm:$0xf]
  %v35 = vld [vmem:[%s0 + $0x50] sm:$0xf]
  %v36 = vld [vmem:[%s0 + $0x54] sm:$0xf]
  %v37 = vld [vmem:[%s0 + $0x58] sm:$0xf]
  %v38 = vld [vmem:[%s0 + $0x5c] sm:$0xf]
  %v39 = vld [vmem:[%s0 + $0x60] sm:$0xf]
  %v40 = vld [vmem:[%s0 + $0x64] sm:$0xf]
  %v41 = vld [vmem:[%s0 + $0x68] sm:$0xf]
  %v42 = vld [vmem:[%s0 + $0x6c] sm:$0xf]
  %v43 = vld [vmem:[%s0 + $0x70] sm:$0xf]
  %v44 = vld [vmem:[%s0 + $0x74] sm:$0xf]
  %v45 = vld [vmem:[%s0 + $0x78] sm:$0xf]
  %v46 = vld [vmem:[%s0 + $0x7c] sm:$0xf]
  %v47 = vld [vmem:[%s1] sm:$0xf]
  %v48 = vld [vmem:[%s1 + $0x4] sm:$0xf]
  %v49 = vld [vmem:[%s1 + $0x8] sm:$0xf]
  %v50 = vld [vmem:[%s1 + $0xc] sm:$0xf]
  %v51 = vld [vmem:[%s1 + $0x10] sm:$0xf]
  %v52 = vld [vmem:[%s1 + $0x14] sm:$0xf]
  %v53 = vld [vmem:[%s2] sm:$0x1]
  %v55 = vperm.slane %v53, 0
  %v89 = vunpack.c.l.b16 %v15
  %v90 = vunpack.c.l.b16 %v16
  %v91 = vunpack.c.l.b16 %v17
  %v92 = vunpack.c.l.b16 %v18
  %v93 = vunpack.c.l.b16 %v19
  %v94 = vunpack.c.l.b16 %v20
  %v95 = vunpack.c.l.b16 %v21
  %v96 = vunpack.c.l.b16 %v22
  %v97 = vunpack.c.l.b16 %v23
  %v98 = vunpack.c.l.b16 %v24
  %v99 = vunpack.c.l.b16 %v25
  %v100 = vunpack.c.l.b16 %v26
  %v101 = vunpack.c.l.b16 %v27
  %v102 = vunpack.c.l.b16 %v28
  %v103 = vunpack.c.l.b16 %v29
  %v104 = vunpack.c.l.b16 %v30
  %v105 = vunpack.c.l.b16 %v31
  %v106 = vunpack.c.l.b16 %v32
  %v107 = vunpack.c.l.b16 %v33
  %v108 = vunpack.c.l.b16 %v34
  %v109 = vunpack.c.l.b16 %v35
  %v110 = vunpack.c.l.b16 %v36
  %v111 = vunpack.c.l.b16 %v37
  %v112 = vunpack.c.l.b16 %v38
  %v113 = vunpack.c.l.b16 %v39
  %v114 = vunpack.c.l.b16 %v40
  %v115 = vunpack.c.l.b16 %v41
  %v116 = vunpack.c.l.b16 %v42
  %v117 = vunpack.c.l.b16 %v43
  %v118 = vunpack.c.l.b16 %v44
  %v119 = vunpack.c.l.b16 %v45
  %v120 = vunpack.c.l.b16 %v46
  %v121 = vpack.c.b16 %v90, %v89
  %v122 = vpack.c.b16 %v92, %v91
  %v123 = vpack.c.b16 %v94, %v93
  %v124 = vpack.c.b16 %v96, %v95
  %v125 = vpack.c.b16 %v98, %v97
  %v126 = vpack.c.b16 %v100, %v99
  %v127 = vpack.c.b16 %v102, %v101
  %v128 = vpack.c.b16 %v104, %v103
  %v129 = vpack.c.b16 %v106, %v105
  %v130 = vpack.c.b16 %v108, %v107
  %v131 = vpack.c.b16 %v110, %v109
  %v132 = vpack.c.b16 %v112, %v111
  %v133 = vpack.c.b16 %v114, %v113
  %v134 = vpack.c.b16 %v116, %v115
  %v135 = vpack.c.b16 %v118, %v117
  %v136 = vpack.c.b16 %v120, %v119
  %v143 = vunpack.c.l.b16 %v47
  %v144 = vunpack.c.l.b16 %v48
  %v145 = vunpack.c.l.b16 %v49
  %v146 = vunpack.c.l.b16 %v50
  %v147 = vunpack.c.l.b16 %v51
  %v148 = vunpack.c.l.b16 %v52
  %v149 = vpack.c.b16 %v144, %v143
  %v150 = vpack.c.b16 %v146, %v145
  %v151 = vpack.c.b16 %v148, %v147
  %vm155 = vcmask 392192
  %v157 = vsel %vm155, %v121, 0
  %v160 = vsel %vm155, %v122, 0
  %v163 = vsel %vm155, %v123, 0
  %v166 = vsel %vm155, %v124, 0
  %v169 = vsel %vm155, %v125, 0
  %v172 = vsel %vm155, %v126, 0
  %v175 = vsel %vm155, %v127, 0
  %v178 = vsel %vm155, %v128, 0
  %v181 = vsel %vm155, %v129, 0
  %v184 = vsel %vm155, %v130, 0
  %v187 = vsel %vm155, %v131, 0
  %v190 = vsel %vm155, %v132, 0
  %v193 = vsel %vm155, %v133, 0
  %v196 = vsel %vm155, %v134, 0
  %v199 = vsel %vm155, %v135, 0
  %v202 = vsel %vm155, %v136, 0
  %204 = vmatpush.bf16.msra.mxu0 0
  %205 = vmatpush.bf16.msra.mxu0 0
  %206 = vmatpush.bf16.msra.mxu0 0
  %207 = vmatpush.bf16.msra.mxu0 0
  %208 = vmatpush.bf16.msra.mxu0 0
  %209 = vmatpush.bf16.msra.mxu0 %v151
  %210 = vmatpush.bf16.msra.mxu0 %v150
  %211 = vmatpush.bf16.msra.mxu0 %v149
  %212 = vmatmul.bf16.gmra.mxu0 %v157
  %v213 = vpop.f32.mrf.mxu0
  %v214 = vadd.f32 %v55, %v213
  %v215 = vpop.f32.mrf.mxu0
  %v216 = vadd.f32 %v55, %v215
  %217 = vmatmul.bf16.gmra.mxu0 %v160
  %v218 = vpop.f32.mrf.mxu0
  %v219 = vadd.f32 %v55, %v218
  %v220 = vpop.f32.mrf.mxu0
  %v221 = vadd.f32 %v55, %v220
  %222 = vmatmul.bf16.gmra.mxu0 %v163
  %v223 = vpop.f32.mrf.mxu0
  %v224 = vadd.f32 %v55, %v223
  %v225 = vpop.f32.mrf.mxu0
  %v226 = vadd.f32 %v55, %v225
  %227 = vmatmul.bf16.gmra.mxu0 %v166
  %v228 = vpop.f32.mrf.mxu0
  %v229 = vadd.f32 %v55, %v228
  %v230 = vpop.f32.mrf.mxu0
  %v231 = vadd.f32 %v55, %v230
  %232 = vmatmul.bf16.gmra.mxu0 %v169
  %v233 = vpop.f32.mrf.mxu0
  %v234 = vadd.f32 %v55, %v233
  %v235 = vpop.f32.mrf.mxu0
  %v236 = vadd.f32 %v55, %v235
  %237 = vmatmul.bf16.gmra.mxu0 %v172
  %v238 = vpop.f32.mrf.mxu0
  %v239 = vadd.f32 %v55, %v238
  %v240 = vpop.f32.mrf.mxu0
  %v241 = vadd.f32 %v55, %v240
  %242 = vmatmul.bf16.gmra.mxu0 %v175
  %v243 = vpop.f32.mrf.mxu0
  %v244 = vadd.f32 %v55, %v243
  %v245 = vpop.f32.mrf.mxu0
  %v246 = vadd.f32 %v55, %v245
  %247 = vmatmul.bf16.gmra.mxu0 %v178
  %v248 = vpop.f32.mrf.mxu0
  %v249 = vadd.f32 %v55, %v248
  %v250 = vpop.f32.mrf.mxu0
  %v251 = vadd.f32 %v55, %v250
  %252 = vmatmul.bf16.gmra.mxu0 %v181
  %v253 = vpop.f32.mrf.mxu0
  %v254 = vadd.f32 %v55, %v253
  %v255 = vpop.f32.mrf.mxu0
  %v256 = vadd.f32 %v55, %v255
  %257 = vmatmul.bf16.gmra.mxu0 %v184
  %v258 = vpop.f32.mrf.mxu0
  %v259 = vadd.f32 %v55, %v258
  %v260 = vpop.f32.mrf.mxu0
  %v261 = vadd.f32 %v55, %v260
  %262 = vmatmul.bf16.gmra.mxu0 %v187
  %v263 = vpop.f32.mrf.mxu0
  %v264 = vadd.f32 %v55, %v263
  %v265 = vpop.f32.mrf.mxu0
  %v266 = vadd.f32 %v55, %v265
  %267 = vmatmul.bf16.gmra.mxu0 %v190
  %v268 = vpop.f32.mrf.mxu0
  %v269 = vadd.f32 %v55, %v268
  %v270 = vpop.f32.mrf.mxu0
  %v271 = vadd.f32 %v55, %v270
  %272 = vmatmul.bf16.gmra.mxu0 %v193
  %v273 = vpop.f32.mrf.mxu0
  %v274 = vadd.f32 %v55, %v273
  %v275 = vpop.f32.mrf.mxu0
  %v276 = vadd.f32 %v55, %v275
  %277 = vmatmul.bf16.gmra.mxu0 %v196
  %v278 = vpop.f32.mrf.mxu0
  %v279 = vadd.f32 %v55, %v278
  %v280 = vpop.f32.mrf.mxu0
  %v281 = vadd.f32 %v55, %v280
  %282 = vmatmul.bf16.gmra.mxu0 %v199
  %v283 = vpop.f32.mrf.mxu0
  %v284 = vadd.f32 %v55, %v283
  %v285 = vpop.f32.mrf.mxu0
  %v286 = vadd.f32 %v55, %v285
  %287 = vmatmul.bf16.gmra.mxu0 %v202
  %v288 = vpop.f32.mrf.mxu0
  %v289 = vadd.f32 %v55, %v288
  %v290 = vpop.f32.mrf.mxu0
  %v291 = vadd.f32 %v55, %v290
  %292 = vdwg.mxu0
  %vm293 = vcmask 261120
  %294 = vst.msk [vmem:[%s3] sm:$0xff] %vm293, %v214
  %295 = vst.msk [vmem:[%s3 + $0x8] sm:$0xff] %vm293, %v216
  %296 = vst.msk [vmem:[%s3 + $0x10] sm:$0xff] %vm293, %v219
  %297 = vst.msk [vmem:[%s3 + $0x18] sm:$0xff] %vm293, %v221
  %298 = vst.msk [vmem:[%s3 + $0x20] sm:$0xff] %vm293, %v224
  %299 = vst.msk [vmem:[%s3 + $0x28] sm:$0xff] %vm293, %v226
  %300 = vst.msk [vmem:[%s3 + $0x30] sm:$0xff] %vm293, %v229
  %301 = vst.msk [vmem:[%s3 + $0x38] sm:$0xff] %vm293, %v231
  %302 = vst.msk [vmem:[%s3 + $0x40] sm:$0xff] %vm293, %v234
  %303 = vst.msk [vmem:[%s3 + $0x48] sm:$0xff] %vm293, %v236
  %304 = vst.msk [vmem:[%s3 + $0x50] sm:$0xff] %vm293, %v239
  %305 = vst.msk [vmem:[%s3 + $0x58] sm:$0xff] %vm293, %v241
  %306 = vst.msk [vmem:[%s3 + $0x60] sm:$0xff] %vm293, %v244
  %307 = vst.msk [vmem:[%s3 + $0x68] sm:$0xff] %vm293, %v246
  %308 = vst.msk [vmem:[%s3 + $0x70] sm:$0xff] %vm293, %v249
  %309 = vst.msk [vmem:[%s3 + $0x78] sm:$0xff] %vm293, %v251
  %310 = vst.msk [vmem:[%s3 + $0x80] sm:$0xff] %vm293, %v254
  %311 = vst.msk [vmem:[%s3 + $0x88] sm:$0xff] %vm293, %v256
  %312 = vst.msk [vmem:[%s3 + $0x90] sm:$0xff] %vm293, %v259
  %313 = vst.msk [vmem:[%s3 + $0x98] sm:$0xff] %vm293, %v261
  %314 = vst.msk [vmem:[%s3 + $0xa0] sm:$0xff] %vm293, %v264
  %315 = vst.msk [vmem:[%s3 + $0xa8] sm:$0xff] %vm293, %v266
  %316 = vst.msk [vmem:[%s3 + $0xb0] sm:$0xff] %vm293, %v269
  %317 = vst.msk [vmem:[%s3 + $0xb8] sm:$0xff] %vm293, %v271
  %318 = vst.msk [vmem:[%s3 + $0xc0] sm:$0xff] %vm293, %v274
  %319 = vst.msk [vmem:[%s3 + $0xc8] sm:$0xff] %vm293, %v276
  %320 = vst.msk [vmem:[%s3 + $0xd0] sm:$0xff] %vm293, %v279
  %321 = vst.msk [vmem:[%s3 + $0xd8] sm:$0xff] %vm293, %v281
  %322 = vst.msk [vmem:[%s3 + $0xe0] sm:$0xff] %vm293, %v284
  %323 = vst.msk [vmem:[%s3 + $0xe8] sm:$0xff] %vm293, %v286
  %324 = vst.msk [vmem:[%s3 + $0xf0] sm:$0xff] %vm293, %v289
  %325 = vst.msk [vmem:[%s3 + $0xf8] sm:$0xff] %vm293, %v291
  // Predicated region
  $region14: #{patch_embed.1} parent=0 // pred_check
    _
  $region15: #{patch_embed.1} parent=0 // pred_check_branch
    %327 = sbr.rel (0) target = $region17
  $region16: #{patch_embed.1} parent=0 // pred_region
    _
  $region17: #{patch_embed.1} parent=0 // pred_fallthru
    _
  // Predicated region
  $region18: #{patch_embed.1} parent=0 // pred_check
    _
  $region19: #{patch_embed.1} parent=0 // pred_check_branch
    %329 = sbr.rel (0) target = $region21
  $region20: #{patch_embed.1} parent=0 // pred_region
    _
  $region21: #{patch_embed.1} parent=0 // pred_fallthru
    _

</llo_original>
